<compile_context>
chip_gen: v5e
topology: v5e:2x2
jax: 0.10.0
libtpu: 0.0.40
codegen_flags: <defaults>
</compile_context>

<pallas_src>
import math
import functools

import jax
import jax.numpy as jnp
from jax.experimental import pallas as pl
from jax.experimental.pallas import tpu as pltpu


# ---------------------------------------------------------------------------
# Helpers
# ---------------------------------------------------------------------------

def _round_up(x, m):
    return -(-x // m) * m


def _pick_tile(dim, desired, align):
    """Largest tile <= desired dividing `dim` that is align-multiple (or full dim)."""
    if dim <= desired:
        return dim
    t = (desired // align) * align
    while t >= align:
        if dim % t == 0:
            return t
        t -= align
    return dim  # no aligned divisor -> keep the whole axis resident


def _pad2(rows, cols, itemsize):
    """Approximate padded VMEM bytes of a 2-D block ((8,128) tiling)."""
    return _round_up(rows, 8) * _round_up(cols, 128) * itemsize


def _vmem_limit(requested_bytes):
    """Generation-aware VMEM clamp: <=~48 MiB on 64-MiB chips (v7x),
    up to ~100 MiB on 128-MiB chips (v5e/v6e)."""
    try:
        cap = int(pltpu.get_tpu_info().vmem_capacity_bytes)
    except Exception:
        cap = 64 << 20
    if cap <= (64 << 20):
        ceiling = cap - (16 << 20)            # leave compiler-scratch headroom
    else:
        ceiling = min(cap - (28 << 20), 100 << 20)
    return int(max(16 << 20, min(requested_bytes, ceiling)))


# ---------------------------------------------------------------------------
# Kernel 1: fused attention sublayer
#   QKV projection -> per-head softmax attention -> o-projection
#   -> residual add -> LayerNorm1        (one batch element per grid step)
# ---------------------------------------------------------------------------

def _attn_sublayer_kernel(x_ref, mask_ref, wqkv_ref, bqkv_ref, wo_ref, bo_ref,
                          lna_ref, lnb_ref, o_ref, *, num_heads, dk, eps, scale):
    x = x_ref[0]                                         # (S, D)
    D = num_heads * dk
    xf = x.astype(jnp.float32)

    # Fused QKV projection (f32 accumulation on the MXU).
    qkv = jnp.dot(x, wqkv_ref[...], preferred_element_type=jnp.float32)
    qkv = qkv + bqkv_ref[...].astype(jnp.float32)        # (S, 3*D)

    key_mask = mask_ref[0]                               # (1, S): 1=attend, 0=pad

    ctx_parts = []
    for h in range(num_heads):                           # static unroll over heads
        q = qkv[:, h * dk:(h + 1) * dk]                  # (S, dk) static lane slices
        k = qkv[:, D + h * dk:D + (h + 1) * dk]
        v = qkv[:, 2 * D + h * dk:2 * D + (h + 1) * dk]
        # scores[i, j] = sum_d q[i, d] * k[j, d]   (q @ k^T without a transpose)
        scores = jax.lax.dot_general(q, k, (((1,), (1,)), ((), ())),
                                     preferred_element_type=jnp.float32) * scale
        scores = jnp.where(key_mask == 0.0, -1e9, scores)   # masked_fill(mask==0, -1e9)
        scores = scores - jnp.max(scores, axis=-1, keepdims=True)
        p = jnp.exp(scores)
        p = p * pl.reciprocal(jnp.sum(p, axis=-1, keepdims=True), approx=True)
        # attention-weight dropout: identity (eval mode)
        ctx_parts.append(jnp.dot(p.astype(x.dtype), v.astype(x.dtype),
                                 preferred_element_type=jnp.float32))
    ctx = jnp.concatenate(ctx_parts, axis=-1)            # (S, D), lane-dense

    attn_out = jnp.dot(ctx.astype(x.dtype), wo_ref[...],
                       preferred_element_type=jnp.float32)
    attn_out = attn_out + bo_ref[...].astype(jnp.float32)

    # residual add + LayerNorm (torch semantics: unbiased std, eps added to std)
    s = xf + attn_out
    mean = jnp.mean(s, axis=-1, keepdims=True)
    d = s - mean
    var = jnp.sum(d * d, axis=-1, keepdims=True) * (1.0 / (D - 1))
    std = jnp.sqrt(var)
    out = (lna_ref[...].astype(jnp.float32) * (d / (std + eps))
           + lnb_ref[...].astype(jnp.float32))
    o_ref[0] = out.astype(o_ref.dtype)


def attention_sublayer(x, mask, params, *, num_heads, eps):
    B, S, D = x.shape
    dk = D // num_heads
    mask3 = mask.astype(jnp.float32).reshape(B, 1, S)    # tiny per-sequence key mask

    kern = functools.partial(_attn_sublayer_kernel, num_heads=num_heads, dk=dk,
                             eps=eps, scale=1.0 / math.sqrt(dk))
    return pl.pallas_call(
        kern,
        out_shape=jax.ShapeDtypeStruct((B, S, D), x.dtype),
        grid_spec=pltpu.PrefetchScalarGridSpec(
            num_scalar_prefetch=0,
            grid=(B,),
            in_specs=[
                pl.BlockSpec((1, S, D), lambda b: (b, 0, 0)),      # x (batch b)
                pl.BlockSpec((1, 1, S), lambda b: (b, 0, 0)),      # key-padding row
                pl.BlockSpec((D, 3 * D), lambda b: (0, 0)),        # W_qkv (resident)
                pl.BlockSpec((1, 3 * D), lambda b: (0, 0)),        # b_qkv
                pl.BlockSpec((D, D), lambda b: (0, 0)),            # W_o   (resident)
                pl.BlockSpec((1, D), lambda b: (0, 0)),            # b_o
                pl.BlockSpec((1, D), lambda b: (0, 0)),            # ln1 a
                pl.BlockSpec((1, D), lambda b: (0, 0)),            # ln1 b
            ],
            out_specs=pl.BlockSpec((1, S, D), lambda b: (b, 0, 0)),
        ),
        compiler_params=pltpu.CompilerParams(dimension_semantics=("parallel",)),
    )(x, mask3,
      params["w_qkv"], params["b_qkv"].reshape(1, 3 * D),
      params["w_o"], params["b_o"].reshape(1, D),
      params["ln1_a"].reshape(1, D), params["ln1_b"].reshape(1, D))


# ---------------------------------------------------------------------------
# Kernel 2: fused FFN sublayer
#   acc += relu(x @ W1[:, k] + b1[k]) @ W2[k, :]  over the d_ff reduction axis,
#   epilogue (k == last): + b2, residual add, LayerNorm2.
# ---------------------------------------------------------------------------

def _ffn_ln_kernel(x_ref, w1_ref, b1_ref, w2_ref, b2_ref, lna_ref, lnb_ref,
                   o_ref, acc_ref, *, eps, dim):
    k = pl.program_id(1)

    @pl.when(k == 0)
    def _():
        acc_ref[...] = jnp.zeros_like(acc_ref)

    h = jnp.dot(x_ref[...], w1_ref[...], preferred_element_type=jnp.float32)
    h = jnp.maximum(h + b1_ref[...].astype(jnp.float32), 0.0)   # ReLU; dropout=identity
    acc_ref[...] += jnp.dot(h.astype(x_ref.dtype), w2_ref[...],
                            preferred_element_type=jnp.float32)

    @pl.when(k == pl.num_programs(1) - 1)
    def _():
        y = acc_ref[...] + b2_ref[...].astype(jnp.float32)
        s = x_ref[...].astype(jnp.float32) + y                   # residual add
        mean = jnp.mean(s, axis=-1, keepdims=True)
        d = s - mean
        var = jnp.sum(d * d, axis=-1, keepdims=True) * (1.0 / (dim - 1))
        std = jnp.sqrt(var)
        out = (lna_ref[...].astype(jnp.float32) * (d / (std + eps))
               + lnb_ref[...].astype(jnp.float32))
        o_ref[...] = out.astype(o_ref.dtype)


def ffn_sublayer(x2d, params, *, eps, tile_m_hint=512, tile_k_hint=2048):
    M, D = x2d.shape
    d_ff = params["w1"].shape[1]

    # M tile: pad M up to a multiple of the tile instead of blowing VMEM.
    tm = min(tile_m_hint, _round_up(M, 8))
    Mp = _round_up(M, tm)
    if Mp != M:
        x2d = jnp.pad(x2d, ((0, Mp - M), (0, 0)))
    # d_ff reduction tile; with the default hint typical d_ff fits entirely
    # (single k step => W1/W2 streamed from HBM exactly once).
    tk = _pick_tile(d_ff, tile_k_hint, 128)

    itemsize = jnp.dtype(x2d.dtype).itemsize
    per_step = (_pad2(tm, D, itemsize)           # x tile
                + _pad2(D, tk, itemsize)         # W1 slab
                + _pad2(1, tk, itemsize)         # b1 slab
                + _pad2(tk, D, itemsize)         # W2 slab
                + 3 * _pad2(1, D, itemsize)      # b2, ln a, ln b
                + _pad2(tm, D, itemsize))        # out tile
    requested = 2 * per_step + _pad2(tm, D, 4) + (8 << 20)   # dbl-buf + acc + headroom

    out = pl.pallas_call(
        functools.partial(_ffn_ln_kernel, eps=eps, dim=D),
        out_shape=jax.ShapeDtypeStruct((Mp, D), x2d.dtype),
        grid_spec=pltpu.PrefetchScalarGridSpec(
            num_scalar_prefetch=0,
            grid=(Mp // tm, d_ff // tk),                          # reduction axis last
            in_specs=[
                pl.BlockSpec((tm, D), lambda i, k: (i, 0)),       # x tile (const in k)
                pl.BlockSpec((D, tk), lambda i, k: (0, k)),       # W1 column slab
                pl.BlockSpec((1, tk), lambda i, k: (0, k)),       # b1 slab
                pl.BlockSpec((tk, D), lambda i, k: (k, 0)),       # W2 row slab
                pl.BlockSpec((1, D), lambda i, k: (0, 0)),        # b2 (epilogue)
                pl.BlockSpec((1, D), lambda i, k: (0, 0)),        # ln2 a
                pl.BlockSpec((1, D), lambda i, k: (0, 0)),        # ln2 b
            ],
            out_specs=pl.BlockSpec((tm, D), lambda i, k: (i, 0)),
            scratch_shapes=[pltpu.VMEM((tm, D), jnp.float32)],
        ),
        compiler_params=pltpu.CompilerParams(
            dimension_semantics=("parallel", "arbitrary"),
            vmem_limit_bytes=_vmem_limit(requested),
        ),
    )(x2d, params["w1"], params["b1"].reshape(1, d_ff),
      params["w2"], params["b2"].reshape(1, D),
      params["ln2_a"].reshape(1, D), params["ln2_b"].reshape(1, D))
    return out[:M] if Mp != M else out


# ---------------------------------------------------------------------------
# EncoderLayer forward (two fused pallas_calls)
# ---------------------------------------------------------------------------

def encoder_layer(x, mask, params, *, num_heads, eps=1e-6):
    """x: (B, S, d_model);  mask: (B, S) with 1 = attend, 0 = padded."""
    B, S, D = x.shape
    h1 = attention_sublayer(x, mask, params, num_heads=num_heads, eps=eps)
    h2 = ffn_sublayer(h1.reshape(B * S, D), params, eps=eps)
    return h2.reshape(B, S, D)


# ---------------------------------------------------------------------------
# Pure-JAX reference (mirrors the PyTorch EncoderLayer in eval mode)
# ---------------------------------------------------------------------------

def encoder_layer_ref(x, mask, params, *, num_heads, eps=1e-6):
    B, S, D = x.shape
    H = num_heads
    dk = D // H

    def layer_norm(y, a, b):
        mean = jnp.mean(y, axis=-1, keepdims=True)
        var = jnp.sum((y - mean) ** 2, axis=-1, keepdims=True) / (D - 1)  # unbiased
        std = jnp.sqrt(var)
        return a * ((y - mean) / (std + eps)) + b

    x2d = x.reshape(B * S, D)
    qkv = (x2d @ params["w_qkv"] + params["b_qkv"]).reshape(B, S, 3, H, dk)
    q = jnp.transpose(qkv[:, :, 0], (0, 2, 1, 3))
    k = jnp.transpose(qkv[:, :, 1], (0, 2, 1, 3))
    v = jnp.transpose(qkv[:, :, 2], (0, 2, 1, 3))
    scores = jnp.einsum("bhqd,bhkd->bhqk", q, k) / math.sqrt(dk)
    scores = jnp.where(mask[:, None, None, :] == 0, -1e9, scores)
    attn = jax.nn.softmax(scores, axis=-1)
    ctx = jnp.einsum("bhqk,bhkd->bhqd", attn, v)
    ctx = jnp.transpose(ctx, (0, 2, 1, 3)).reshape(B * S, D)
    attn_out = ctx @ params["w_o"] + params["b_o"]
    h1 = layer_norm(x2d + attn_out, params["ln1_a"], params["ln1_b"])
    ffn = jnp.maximum(h1 @ params["w1"] + params["b1"], 0.0) @ params["w2"] + params["b2"]
    h2 = layer_norm(h1 + ffn, params["ln2_a"], params["ln2_b"])
    return h2.reshape(B, S, D)


# ---------------------------------------------------------------------------
# Params (nn.Linear-style init; weights stored as (in, out))
# ---------------------------------------------------------------------------

def init_params(key, d_model, d_ff, dtype=jnp.float32):
    ks = jax.random.split(key, 8)

    def lin(kw, kb, fan_in, fan_out):
        bound = 1.0 / math.sqrt(fan_in)
        w = jax.random.uniform(kw, (fan_in, fan_out), dtype, -bound, bound)
        b = jax.random.uniform(kb, (fan_out,), dtype, -bound, bound)
        return w, b

    w_qkv, b_qkv = lin(ks[0], ks[1], d_model, 3 * d_model)
    w_o, b_o = lin(ks[2], ks[3], d_model, d_model)
    w1, b1 = lin(ks[4], ks[5], d_model, d_ff)
    w2, b2 = lin(ks[6], ks[7], d_ff, d_model)
    return dict(
        w_qkv=w_qkv, b_qkv=b_qkv, w_o=w_o, b_o=b_o,
        w1=w1, b1=b1, w2=w2, b2=b2,
        ln1_a=jnp.ones((d_model,), dtype), ln1_b=jnp.zeros((d_model,), dtype),
        ln2_a=jnp.ones((d_model,), dtype), ln2_b=jnp.zeros((d_model,), dtype),
    )


if __name__ == "__main__":
    batch, seq, d_model, d_ff, num_heads = 2, 8, 32, 64, 4
    key = jax.random.PRNGKey(0)
    kx, kp = jax.random.split(key)

    x = jax.random.normal(kx, (batch, seq, d_model), jnp.float32)
    # padding mask: sequence 0 fully valid, sequence 1 valid for first 5 tokens
    lengths = jnp.array([seq, 5])
    mask = (jnp.arange(seq)[None, :] < lengths[:, None]).astype(jnp.float32)
    params = init_params(kp, d_model, d_ff)

    out = encoder_layer(x, mask, params, num_heads=num_heads)
    out = jax.block_until_ready(out)

    ref = encoder_layer_ref(x, mask, params, num_heads=num_heads)
    assert out.shape == (batch, seq, d_model)
    # 5e-3 tolerance: softmax uses the EUP approximate reciprocal.
    max_err = float(jnp.max(jnp.abs(out - ref)))
    assert jnp.allclose(out, ref, atol=5e-3, rtol=5e-3), (
        f"mismatch vs reference (max abs err {max_err})")

    print("KERNEL_OK")
</pallas_src>

<mosaic_0001>
module attributes {stable_mosaic.version = 11 : i64} {
  func.func @_attn_sublayer_kernel(%arg0: i32, %arg1: memref<1x8x32xf32, #tpu.memory_space<vmem>>, %arg2: memref<1x1x8xf32, #tpu.memory_space<vmem>>, %arg3: memref<32x96xf32, #tpu.memory_space<vmem>>, %arg4: memref<1x96xf32, #tpu.memory_space<vmem>>, %arg5: memref<32x32xf32, #tpu.memory_space<vmem>>, %arg6: memref<1x32xf32, #tpu.memory_space<vmem>>, %arg7: memref<1x32xf32, #tpu.memory_space<vmem>>, %arg8: memref<1x32xf32, #tpu.memory_space<vmem>>, %arg9: memref<1x8x32xf32, #tpu.memory_space<vmem>>) attributes {dimension_semantics = [#tpu.dimension_semantics<parallel>], iteration_bounds = array<i64: 2>, scalar_prefetch = 0 : i64, scratch_operands = 0 : i64, tpu.core_type = #tpu.core_type<tc>, window_params = [{transform_indices = @transform_0, window_bounds = array<i64: 1, 8, 32>}, {transform_indices = @transform_1, window_bounds = array<i64: 1, 1, 8>}, {pipeline_mode = #tpu.pipeline_mode<synchronous>, transform_indices = @transform_2, window_bounds = array<i64: 32, 96>}, {pipeline_mode = #tpu.pipeline_mode<synchronous>, transform_indices = @transform_3, window_bounds = array<i64: 1, 96>}, {pipeline_mode = #tpu.pipeline_mode<synchronous>, transform_indices = @transform_4, window_bounds = array<i64: 32, 32>}, {pipeline_mode = #tpu.pipeline_mode<synchronous>, transform_indices = @transform_5, window_bounds = array<i64: 1, 32>}, {pipeline_mode = #tpu.pipeline_mode<synchronous>, transform_indices = @transform_6, window_bounds = array<i64: 1, 32>}, {pipeline_mode = #tpu.pipeline_mode<synchronous>, transform_indices = @transform_7, window_bounds = array<i64: 1, 32>}, {transform_indices = @transform_8, window_bounds = array<i64: 1, 8, 32>}]} {
    %c0 = arith.constant 0 : index
    %c0_0 = arith.constant 0 : index
    %c0_1 = arith.constant 0 : index
    %0 = vector.load %arg1[%c0, %c0_0, %c0_1] : memref<1x8x32xf32, #tpu.memory_space<vmem>>, vector<1x8x32xf32>
    %1 = vector.shape_cast %0 : vector<1x8x32xf32> to vector<8x32xf32>
    %c0_2 = arith.constant 0 : index
    %c0_3 = arith.constant 0 : index
    %2 = vector.load %arg3[%c0_2, %c0_3] : memref<32x96xf32, #tpu.memory_space<vmem>>, vector<32x96xf32>
    %cst = arith.constant dense<0.000000e+00> : vector<8x96xf32>
    %3 = tpu.matmul %1, %2, %cst {dimension_numbers = #tpu.dot_dimension_numbers<[1], [0], [0], [1], [0, 0, 1, 1], [], []>} : vector<8x32xf32>, vector<32x96xf32>, vector<8x96xf32> -> vector<8x96xf32>
    %c0_4 = arith.constant 0 : index
    %c0_5 = arith.constant 0 : index
    %4 = vector.load %arg4[%c0_4, %c0_5] : memref<1x96xf32, #tpu.memory_space<vmem>>, vector<1x96xf32>
    %5 = vector.broadcast %4 : vector<1x96xf32> to vector<8x96xf32>
    %6 = arith.addf %3, %5 : vector<8x96xf32>
    %c0_6 = arith.constant 0 : index
    %c0_7 = arith.constant 0 : index
    %c0_8 = arith.constant 0 : index
    %7 = vector.load %arg2[%c0_6, %c0_7, %c0_8] : memref<1x1x8xf32, #tpu.memory_space<vmem>>, vector<1x1x8xf32>
    %8 = vector.shape_cast %7 : vector<1x1x8xf32> to vector<1x8xf32>
    %9 = vector.extract_strided_slice %6 {offsets = [0, 0], sizes = [8, 8], strides = [1, 1]} : vector<8x96xf32> to vector<8x8xf32>
    %10 = vector.extract_strided_slice %6 {offsets = [0, 32], sizes = [8, 8], strides = [1, 1]} : vector<8x96xf32> to vector<8x8xf32>
    %11 = vector.extract_strided_slice %6 {offsets = [0, 64], sizes = [8, 8], strides = [1, 1]} : vector<8x96xf32> to vector<8x8xf32>
    %cst_9 = arith.constant dense<0.000000e+00> : vector<8x8xf32>
    %12 = tpu.matmul %9, %10, %cst_9 {dimension_numbers = #tpu.dot_dimension_numbers<[1], [1], [0], [0], [0, 0, 1, 0], [], []>} : vector<8x8xf32>, vector<8x8xf32>, vector<8x8xf32> -> vector<8x8xf32>
    %cst_10 = arith.constant 0.353553385 : f32
    %13 = vector.broadcast %cst_10 : f32 to vector<8x8xf32>
    %14 = arith.mulf %12, %13 : vector<8x8xf32>
    %cst_11 = arith.constant 0.000000e+00 : f32
    %15 = vector.broadcast %cst_11 : f32 to vector<1x8xf32>
    %16 = arith.cmpf oeq, %8, %15 : vector<1x8xf32>
    %cst_12 = arith.constant -1.000000e+09 : f32
    %17 = vector.shape_cast %16 : vector<1x8xi1> to vector<1x8xi1>
    %18 = vector.broadcast %17 : vector<1x8xi1> to vector<8x8xi1>
    %19 = vector.broadcast %cst_12 : f32 to vector<8x8xf32>
    %20 = arith.select %18, %19, %14 : vector<8x8xi1>, vector<8x8xf32>
    %cst_13 = arith.constant dense<0xFF800000> : vector<8xf32>
    %21 = vector.multi_reduction <maximumf>, %20, %cst_13 [1] : vector<8x8xf32> to vector<8xf32>
    %22 = vector.shape_cast %21 : vector<8xf32> to vector<8x1xf32>
    %23 = vector.broadcast %22 : vector<8x1xf32> to vector<8x8xf32>
    %24 = arith.subf %20, %23 : vector<8x8xf32>
    %25 = math.exp %24 : vector<8x8xf32>
    %cst_14 = arith.constant dense<0.000000e+00> : vector<8xf32>
    %26 = vector.multi_reduction <add>, %25, %cst_14 [1] : vector<8x8xf32> to vector<8xf32>
    %27 = vector.shape_cast %26 : vector<8xf32> to vector<8x1xf32>
    %28 = tpu.reciprocal %27 {approx = true} : vector<8x1xf32> -> vector<8x1xf32>
    %29 = vector.broadcast %28 : vector<8x1xf32> to vector<8x8xf32>
    %30 = arith.mulf %25, %29 : vector<8x8xf32>
    %cst_15 = arith.constant dense<0.000000e+00> : vector<8x8xf32>
    %31 = tpu.matmul %30, %11, %cst_15 {dimension_numbers = #tpu.dot_dimension_numbers<[1], [0], [0], [1], [0, 0, 1, 1], [], []>} : vector<8x8xf32>, vector<8x8xf32>, vector<8x8xf32> -> vector<8x8xf32>
    %32 = vector.extract_strided_slice %6 {offsets = [0, 8], sizes = [8, 8], strides = [1, 1]} : vector<8x96xf32> to vector<8x8xf32>
    %33 = vector.extract_strided_slice %6 {offsets = [0, 40], sizes = [8, 8], strides = [1, 1]} : vector<8x96xf32> to vector<8x8xf32>
    %34 = vector.extract_strided_slice %6 {offsets = [0, 72], sizes = [8, 8], strides = [1, 1]} : vector<8x96xf32> to vector<8x8xf32>
    %cst_16 = arith.constant dense<0.000000e+00> : vector<8x8xf32>
    %35 = tpu.matmul %32, %33, %cst_16 {dimension_numbers = #tpu.dot_dimension_numbers<[1], [1], [0], [0], [0, 0, 1, 0], [], []>} : vector<8x8xf32>, vector<8x8xf32>, vector<8x8xf32> -> vector<8x8xf32>
    %cst_17 = arith.constant 0.353553385 : f32
    %36 = vector.broadcast %cst_17 : f32 to vector<8x8xf32>
    %37 = arith.mulf %35, %36 : vector<8x8xf32>
    %cst_18 = arith.constant 0.000000e+00 : f32
    %38 = vector.broadcast %cst_18 : f32 to vector<1x8xf32>
    %39 = arith.cmpf oeq, %8, %38 : vector<1x8xf32>
    %cst_19 = arith.constant -1.000000e+09 : f32
    %40 = vector.shape_cast %39 : vector<1x8xi1> to vector<1x8xi1>
    %41 = vector.broadcast %40 : vector<1x8xi1> to vector<8x8xi1>
    %42 = vector.broadcast %cst_19 : f32 to vector<8x8xf32>
    %43 = arith.select %41, %42, %37 : vector<8x8xi1>, vector<8x8xf32>
    %cst_20 = arith.constant dense<0xFF800000> : vector<8xf32>
    %44 = vector.multi_reduction <maximumf>, %43, %cst_20 [1] : vector<8x8xf32> to vector<8xf32>
    %45 = vector.shape_cast %44 : vector<8xf32> to vector<8x1xf32>
    %46 = vector.broadcast %45 : vector<8x1xf32> to vector<8x8xf32>
    %47 = arith.subf %43, %46 : vector<8x8xf32>
    %48 = math.exp %47 : vector<8x8xf32>
    %cst_21 = arith.constant dense<0.000000e+00> : vector<8xf32>
    %49 = vector.multi_reduction <add>, %48, %cst_21 [1] : vector<8x8xf32> to vector<8xf32>
    %50 = vector.shape_cast %49 : vector<8xf32> to vector<8x1xf32>
    %51 = tpu.reciprocal %50 {approx = true} : vector<8x1xf32> -> vector<8x1xf32>
    %52 = vector.broadcast %51 : vector<8x1xf32> to vector<8x8xf32>
    %53 = arith.mulf %48, %52 : vector<8x8xf32>
    %cst_22 = arith.constant dense<0.000000e+00> : vector<8x8xf32>
    %54 = tpu.matmul %53, %34, %cst_22 {dimension_numbers = #tpu.dot_dimension_numbers<[1], [0], [0], [1], [0, 0, 1, 1], [], []>} : vector<8x8xf32>, vector<8x8xf32>, vector<8x8xf32> -> vector<8x8xf32>
    %55 = vector.extract_strided_slice %6 {offsets = [0, 16], sizes = [8, 8], strides = [1, 1]} : vector<8x96xf32> to vector<8x8xf32>
    %56 = vector.extract_strided_slice %6 {offsets = [0, 48], sizes = [8, 8], strides = [1, 1]} : vector<8x96xf32> to vector<8x8xf32>
    %57 = vector.extract_strided_slice %6 {offsets = [0, 80], sizes = [8, 8], strides = [1, 1]} : vector<8x96xf32> to vector<8x8xf32>
    %cst_23 = arith.constant dense<0.000000e+00> : vector<8x8xf32>
    %58 = tpu.matmul %55, %56, %cst_23 {dimension_numbers = #tpu.dot_dimension_numbers<[1], [1], [0], [0], [0, 0, 1, 0], [], []>} : vector<8x8xf32>, vector<8x8xf32>, vector<8x8xf32> -> vector<8x8xf32>
    %cst_24 = arith.constant 0.353553385 : f32
    %59 = vector.broadcast %cst_24 : f32 to vector<8x8xf32>
    %60 = arith.mulf %58, %59 : vector<8x8xf32>
    %cst_25 = arith.constant 0.000000e+00 : f32
    %61 = vector.broadcast %cst_25 : f32 to vector<1x8xf32>
    %62 = arith.cmpf oeq, %8, %61 : vector<1x8xf32>
    %cst_26 = arith.constant -1.000000e+09 : f32
    %63 = vector.shape_cast %62 : vector<1x8xi1> to vector<1x8xi1>
    %64 = vector.broadcast %63 : vector<1x8xi1> to vector<8x8xi1>
    %65 = vector.broadcast %cst_26 : f32 to vector<8x8xf32>
    %66 = arith.select %64, %65, %60 : vector<8x8xi1>, vector<8x8xf32>
    %cst_27 = arith.constant dense<0xFF800000> : vector<8xf32>
    %67 = vector.multi_reduction <maximumf>, %66, %cst_27 [1] : vector<8x8xf32> to vector<8xf32>
    %68 = vector.shape_cast %67 : vector<8xf32> to vector<8x1xf32>
    %69 = vector.broadcast %68 : vector<8x1xf32> to vector<8x8xf32>
    %70 = arith.subf %66, %69 : vector<8x8xf32>
    %71 = math.exp %70 : vector<8x8xf32>
    %cst_28 = arith.constant dense<0.000000e+00> : vector<8xf32>
    %72 = vector.multi_reduction <add>, %71, %cst_28 [1] : vector<8x8xf32> to vector<8xf32>
    %73 = vector.shape_cast %72 : vector<8xf32> to vector<8x1xf32>
    %74 = tpu.reciprocal %73 {approx = true} : vector<8x1xf32> -> vector<8x1xf32>
    %75 = vector.broadcast %74 : vector<8x1xf32> to vector<8x8xf32>
    %76 = arith.mulf %71, %75 : vector<8x8xf32>
    %cst_29 = arith.constant dense<0.000000e+00> : vector<8x8xf32>
    %77 = tpu.matmul %76, %57, %cst_29 {dimension_numbers = #tpu.dot_dimension_numbers<[1], [0], [0], [1], [0, 0, 1, 1], [], []>} : vector<8x8xf32>, vector<8x8xf32>, vector<8x8xf32> -> vector<8x8xf32>
    %78 = vector.extract_strided_slice %6 {offsets = [0, 24], sizes = [8, 8], strides = [1, 1]} : vector<8x96xf32> to vector<8x8xf32>
    %79 = vector.extract_strided_slice %6 {offsets = [0, 56], sizes = [8, 8], strides = [1, 1]} : vector<8x96xf32> to vector<8x8xf32>
    %80 = vector.extract_strided_slice %6 {offsets = [0, 88], sizes = [8, 8], strides = [1, 1]} : vector<8x96xf32> to vector<8x8xf32>
    %cst_30 = arith.constant dense<0.000000e+00> : vector<8x8xf32>
    %81 = tpu.matmul %78, %79, %cst_30 {dimension_numbers = #tpu.dot_dimension_numbers<[1], [1], [0], [0], [0, 0, 1, 0], [], []>} : vector<8x8xf32>, vector<8x8xf32>, vector<8x8xf32> -> vector<8x8xf32>
    %cst_31 = arith.constant 0.353553385 : f32
    %82 = vector.broadcast %cst_31 : f32 to vector<8x8xf32>
    %83 = arith.mulf %81, %82 : vector<8x8xf32>
    %cst_32 = arith.constant 0.000000e+00 : f32
    %84 = vector.broadcast %cst_32 : f32 to vector<1x8xf32>
    %85 = arith.cmpf oeq, %8, %84 : vector<1x8xf32>
    %cst_33 = arith.constant -1.000000e+09 : f32
    %86 = vector.shape_cast %85 : vector<1x8xi1> to vector<1x8xi1>
    %87 = vector.broadcast %86 : vector<1x8xi1> to vector<8x8xi1>
    %88 = vector.broadcast %cst_33 : f32 to vector<8x8xf32>
    %89 = arith.select %87, %88, %83 : vector<8x8xi1>, vector<8x8xf32>
    %cst_34 = arith.constant dense<0xFF800000> : vector<8xf32>
    %90 = vector.multi_reduction <maximumf>, %89, %cst_34 [1] : vector<8x8xf32> to vector<8xf32>
    %91 = vector.shape_cast %90 : vector<8xf32> to vector<8x1xf32>
    %92 = vector.broadcast %91 : vector<8x1xf32> to vector<8x8xf32>
    %93 = arith.subf %89, %92 : vector<8x8xf32>
    %94 = math.exp %93 : vector<8x8xf32>
    %cst_35 = arith.constant dense<0.000000e+00> : vector<8xf32>
    %95 = vector.multi_reduction <add>, %94, %cst_35 [1] : vector<8x8xf32> to vector<8xf32>
    %96 = vector.shape_cast %95 : vector<8xf32> to vector<8x1xf32>
    %97 = tpu.reciprocal %96 {approx = true} : vector<8x1xf32> -> vector<8x1xf32>
    %98 = vector.broadcast %97 : vector<8x1xf32> to vector<8x8xf32>
    %99 = arith.mulf %94, %98 : vector<8x8xf32>
    %cst_36 = arith.constant dense<0.000000e+00> : vector<8x8xf32>
    %100 = tpu.matmul %99, %80, %cst_36 {dimension_numbers = #tpu.dot_dimension_numbers<[1], [0], [0], [1], [0, 0, 1, 1], [], []>} : vector<8x8xf32>, vector<8x8xf32>, vector<8x8xf32> -> vector<8x8xf32>
    %101 = tpu.concatenate %31, %54, %77, %100 in 1 : vector<8x8xf32>, vector<8x8xf32>, vector<8x8xf32>, vector<8x8xf32> -> vector<8x32xf32>
    %c0_37 = arith.constant 0 : index
    %c0_38 = arith.constant 0 : index
    %102 = vector.load %arg5[%c0_37, %c0_38] : memref<32x32xf32, #tpu.memory_space<vmem>>, vector<32x32xf32>
    %cst_39 = arith.constant dense<0.000000e+00> : vector<8x32xf32>
    %103 = tpu.matmul %101, %102, %cst_39 {dimension_numbers = #tpu.dot_dimension_numbers<[1], [0], [0], [1], [0, 0, 1, 1], [], []>} : vector<8x32xf32>, vector<32x32xf32>, vector<8x32xf32> -> vector<8x32xf32>
    %c0_40 = arith.constant 0 : index
    %c0_41 = arith.constant 0 : index
    %104 = vector.load %arg6[%c0_40, %c0_41] : memref<1x32xf32, #tpu.memory_space<vmem>>, vector<1x32xf32>
    %105 = vector.broadcast %104 : vector<1x32xf32> to vector<8x32xf32>
    %106 = arith.addf %103, %105 : vector<8x32xf32>
    %107 = arith.addf %1, %106 : vector<8x32xf32>
    %cst_42 = arith.constant dense<0.000000e+00> : vector<8xf32>
    %108 = vector.multi_reduction <add>, %107, %cst_42 [1] : vector<8x32xf32> to vector<8xf32>
    %109 = vector.shape_cast %108 : vector<8xf32> to vector<8x1xf32>
    %cst_43 = arith.constant 3.200000e+01 : f32
    %110 = vector.broadcast %cst_43 : f32 to vector<8x1xf32>
    %111 = arith.divf %109, %110 : vector<8x1xf32>
    %112 = vector.broadcast %111 : vector<8x1xf32> to vector<8x32xf32>
    %113 = arith.subf %107, %112 : vector<8x32xf32>
    %114 = arith.mulf %113, %113 : vector<8x32xf32>
    %cst_44 = arith.constant dense<0.000000e+00> : vector<8xf32>
    %115 = vector.multi_reduction <add>, %114, %cst_44 [1] : vector<8x32xf32> to vector<8xf32>
    %116 = vector.shape_cast %115 : vector<8xf32> to vector<8x1xf32>
    %cst_45 = arith.constant 0.0322580636 : f32
    %117 = vector.broadcast %cst_45 : f32 to vector<8x1xf32>
    %118 = arith.mulf %116, %117 : vector<8x1xf32>
    %119 = math.sqrt %118 : vector<8x1xf32>
    %c0_46 = arith.constant 0 : index
    %c0_47 = arith.constant 0 : index
    %120 = vector.load %arg7[%c0_46, %c0_47] : memref<1x32xf32, #tpu.memory_space<vmem>>, vector<1x32xf32>
    %cst_48 = arith.constant 9.99999997E-7 : f32
    %121 = vector.broadcast %cst_48 : f32 to vector<8x1xf32>
    %122 = arith.addf %119, %121 : vector<8x1xf32>
    %123 = vector.broadcast %122 : vector<8x1xf32> to vector<8x32xf32>
    %124 = arith.divf %113, %123 : vector<8x32xf32>
    %125 = vector.broadcast %120 : vector<1x32xf32> to vector<8x32xf32>
    %126 = arith.mulf %125, %124 : vector<8x32xf32>
    %c0_49 = arith.constant 0 : index
    %c0_50 = arith.constant 0 : index
    %127 = vector.load %arg8[%c0_49, %c0_50] : memref<1x32xf32, #tpu.memory_space<vmem>>, vector<1x32xf32>
    %128 = vector.broadcast %127 : vector<1x32xf32> to vector<8x32xf32>
    %129 = arith.addf %126, %128 : vector<8x32xf32>
    %c0_51 = arith.constant 0 : index
    %c0_52 = arith.constant 0 : index
    %c0_53 = arith.constant 0 : index
    %130 = vector.load %arg9[%c0_51, %c0_52, %c0_53] : memref<1x8x32xf32, #tpu.memory_space<vmem>>, vector<1x8x32xf32>
    %131 = vector.shape_cast %130 : vector<1x8x32xf32> to vector<8x32xf32>
    %132 = vector.shape_cast %129 : vector<8x32xf32> to vector<1x8x32xf32>
    tpu.vector_store %arg9[%c0_51, %c0_52, %c0_53], %132 {strides = array<i32>} : memref<1x8x32xf32, #tpu.memory_space<vmem>>, vector<1x8x32xf32>,
    return
  }
  func.func @transform_0(%arg0: i32) -> (i32, i32, i32) {
    %c0_i32 = arith.constant 0 : i32
    %c0_i32_0 = arith.constant 0 : i32
    %c0_i32_1 = arith.constant 0 : i32
    return %arg0, %c0_i32, %c0_i32_0 : i32, i32, i32
  }
  func.func @transform_1(%arg0: i32) -> (i32, i32, i32) {
    %c0_i32 = arith.constant 0 : i32
    %c0_i32_0 = arith.constant 0 : i32
    %c0_i32_1 = arith.constant 0 : i32
    return %arg0, %c0_i32, %c0_i32_0 : i32, i32, i32
  }
  func.func @transform_2(%arg0: i32) -> (i32, i32) {
    %c0_i32 = arith.constant 0 : i32
    %c0_i32_0 = arith.constant 0 : i32
    %c0_i32_1 = arith.constant 0 : i32
    return %c0_i32, %c0_i32_0 : i32, i32
  }
  func.func @transform_3(%arg0: i32) -> (i32, i32) {
    %c0_i32 = arith.constant 0 : i32
    %c0_i32_0 = arith.constant 0 : i32
    %c0_i32_1 = arith.constant 0 : i32
    return %c0_i32, %c0_i32_0 : i32, i32
  }
  func.func @transform_4(%arg0: i32) -> (i32, i32) {
    %c0_i32 = arith.constant 0 : i32
    %c0_i32_0 = arith.constant 0 : i32
    %c0_i32_1 = arith.constant 0 : i32
    return %c0_i32, %c0_i32_0 : i32, i32
  }
  func.func @transform_5(%arg0: i32) -> (i32, i32) {
    %c0_i32 = arith.constant 0 : i32
    %c0_i32_0 = arith.constant 0 : i32
    %c0_i32_1 = arith.constant 0 : i32
    return %c0_i32, %c0_i32_0 : i32, i32
  }
  func.func @transform_6(%arg0: i32) -> (i32, i32) {
    %c0_i32 = arith.constant 0 : i32
    %c0_i32_0 = arith.constant 0 : i32
    %c0_i32_1 = arith.constant 0 : i32
    return %c0_i32, %c0_i32_0 : i32, i32
  }
  func.func @transform_7(%arg0: i32) -> (i32, i32) {
    %c0_i32 = arith.constant 0 : i32
    %c0_i32_0 = arith.constant 0 : i32
    %c0_i32_1 = arith.constant 0 : i32
    return %c0_i32, %c0_i32_0 : i32, i32
  }
  func.func @transform_8(%arg0: i32) -> (i32, i32, i32) {
    %c0_i32 = arith.constant 0 : i32
    %c0_i32_0 = arith.constant 0 : i32
    %c0_i32_1 = arith.constant 0 : i32
    return %arg0, %c0_i32, %c0_i32_0 : i32, i32, i32
  }
}

</mosaic_0001>

<llo_original>
// kernel: tpu_custom_call.1
$region0: #{tpu_custom_call.1}
  #allocation0 [shape = 'u32[]', space=smem, size = 0x4, offset = 0x4, fixed_abs, tag = 'smem constant byte address 0x4 - core index']
  #allocation1 [shape = 'u32[72,128]{1,0:T(1,128)}', space=vmem, size = 0x9000, scoped, tag = 'internal scratch']
  %s0 = inlined_call_operand.hbm [shape: f32[2,8,32], index: 0, kind: input, shape index: {}]
  %s1 = inlined_call_operand.hbm [shape: f32[2,1,8], index: 1, kind: input, shape index: {}]
  %s2 = inlined_call_operand.hbm [shape: f32[32,96], index: 2, kind: input, shape index: {}]
  %s3 = inlined_call_operand.vmem [shape: f32[1,96], index: 3, kind: input, shape index: {}]
  %s4 = inlined_call_operand.hbm [shape: f32[32,32], index: 4, kind: input, shape index: {}]
  %s5 = inlined_call_operand.vmem [shape: f32[1,32], index: 5, kind: input, shape index: {}]
  %s6 = inlined_call_operand.vmem [shape: f32[1,32], index: 6, kind: input, shape index: {}]
  %s7 = inlined_call_operand.vmem [shape: f32[1,32], index: 7, kind: input, shape index: {}]
  %s8 = inlined_call_operand.hbm [shape: f32[2,8,32], index: 8, kind: output, shape index: {}]
  %s9 = sld [smem:[#allocation0]]
  $region81: #{tpu_custom_call.1} parent=0
    _
  %s11 = ssub.s32 1, %s9
  %s12 = scalar_select 0, %s11, %s9
  $region1: #{tpu_custom_call.1} parent=0
    #allocation2 [shape = 'u8[8192]{0}', space=vmem, size = 0x2000, scoped, tag = 'input window, operand 0']
    #allocation3 [shape = 's32[2]{0}', space=sflag, size = 0x8, scoped, tag = 'scoped memory for tpu_custom_call.1']
    #allocation4 [shape = 's32[2]{0}', space=sflag, size = 0x8, scoped, tag = 'scoped memory for tpu_custom_call.1']
    #allocation5 [shape = 'u8[1024]{0}', space=vmem, size = 0x400, scoped, tag = 'input window, operand 1']
    #allocation6 [shape = 's32[2]{0}', space=sflag, size = 0x8, scoped, tag = 'scoped memory for tpu_custom_call.1']
    #allocation7 [shape = 'u8[16384]{0}', space=vmem, size = 0x4000, scoped, tag = 'input window, operand 2, single buffered']
    #allocation8 [shape = 'u8[16384]{0}', space=vmem, size = 0x4000, scoped, tag = 'input window, operand 4, single buffered']
    #allocation9 [shape = 's32[1]{0}', space=sflag, size = 0x4, scoped, tag = 'scoped memory for tpu_custom_call.1']
    #allocation10 [shape = 'u8[8192]{0}', space=vmem, size = 0x2000, scoped, tag = 'output window, operand 0']
    %13 = vsyncpa [#allocation3], 0
    %s14 = scalar_lea.sflag [#allocation3], 1
    %15 = vsyncpa %s14, 0
    %16 = vsyncpa [#allocation6], 0
    %s17 = scalar_lea.sflag [#allocation6], 1
    %18 = vsyncpa %s17, 0
    %19 = vsyncpa [#allocation9], 0
    %20 = vsyncpa [#allocation4], 0
    %s21 = scalar_lea.sflag [#allocation4], 1
    %22 = vsyncpa %s21, 0
    loop: start=0, step=1, limit=4
    $region2: #{tpu_custom_call.1} parent=1 // loop_pre_header
      _
    $region3: #{tpu_custom_call.1} parent=1 // loop_header
      %s24 = sphi 0, %s28
      %p25 = scmp.ge.s32.totalorder %s24, 4
      %s34 = sphi 0, %s36
      %s37 = sphi 0, %s34
      %s38 = sphi 0, %s37
      %s54 = sphi 0, %s38
      %s60 = sphi 0, %s62
      %s63 = sphi 0, %s60
      %s64 = sphi 0, %s63
      %s80 = sphi 0, %s64
      %s84 = sphi 0, %s84
      %s86 = sphi 0, %s84
      %s87 = sphi 0, %s86
      %s101 = sphi 0, %s87
      %s105 = sphi 0, %s105
      %s107 = sphi 0, %s105
      %s108 = sphi 0, %s107
      %s122 = sphi 0, %s108
      %s126 = sphi 0, %s126
      %s128 = sphi 0, %s126
      %s129 = sphi 0, %s128
      %s143 = sphi 0, %s129
      %s147 = sphi 0, %s147
      %s149 = sphi 0, %s147
      %s150 = sphi 0, %s149
      %s164 = sphi 0, %s150
      %s168 = sphi 0, %s168
      %s170 = sphi 0, %s168
      %s171 = sphi 0, %s170
      %s185 = sphi 0, %s171
      %s189 = sphi 0, %s189
      %s191 = sphi 0, %s189
      %s192 = sphi 0, %s191
      %s206 = sphi 0, %s192
      %s212 = sphi 0, %s214
      %s215 = sphi 0, %s212
      %s216 = sphi 0, %s215
      %s232 = sphi 0, %s216
    $region4: #{tpu_custom_call.1} parent=1 // loop_header_branch
      %27 = sbr.rel (%p25) target = $region8
    $region5: #{tpu_custom_call.1} parent=1 // loop_body
      %s29 = ssub.s32 %s24, 1
      %s30 = ssub.s32 %s24, 2
      %s31 = sadd.s32 %s24, 1
      %s32 = ssub.s32 %s24, %s31
      %p33 = scmp.eq.s32.totalorder %s32, 0
      %s35 = sadd.s32 %s34, 1
      %s36 = scalar_select %p33, %s34, %s35
      %p39 = pneg %p33
      %p40 = scmp.eq.s32.totalorder %s24, 1
      %p41 = por %p39, %p40
      %p42 = scmp.ne.s32.totalorder %s34, %s37
      %p43 = scmp.eq.s32.totalorder %s24, 0
      %p44 = por %p42, %p43
      %p45 = scmp.ne.s32.totalorder %s34, %s37
      %p46 = scmp.eq.s32.totalorder %s29, 1
      %p47 = por %p45, %p46
      %p48 = scmp.ne.s32.totalorder %s37, %s38
      %p49 = scmp.eq.s32.totalorder %s29, 0
      %p50 = por %p48, %p49
      %p51 = scmp.ne.s32.totalorder %s37, %s38
      %p52 = scmp.eq.s32.totalorder %s30, 1
      %p53 = por %p51, %p52
      %p55 = scmp.ne.s32.totalorder %s38, %s54
      %p56 = scmp.eq.s32.totalorder %s30, 0
      %p57 = por %p55, %p56
      %s58 = ssub.s32 %s24, %s31
      %p59 = scmp.eq.s32.totalorder %s58, 0
      %s61 = sadd.s32 %s60, 1
      %s62 = scalar_select %p59, %s60, %s61
      %p65 = pneg %p59
      %p66 = scmp.eq.s32.totalorder %s24, 1
      %p67 = por %p65, %p66
      %p68 = scmp.ne.s32.totalorder %s60, %s63
      %p69 = scmp.eq.s32.totalorder %s24, 0
      %p70 = por %p68, %p69
      %p71 = scmp.ne.s32.totalorder %s60, %s63
      %p72 = scmp.eq.s32.totalorder %s29, 1
      %p73 = por %p71, %p72
      %p74 = scmp.ne.s32.totalorder %s63, %s64
      %p75 = scmp.eq.s32.totalorder %s29, 0
      %p76 = por %p74, %p75
      %p77 = scmp.ne.s32.totalorder %s63, %s64
      %p78 = scmp.eq.s32.totalorder %s30, 1
      %p79 = por %p77, %p78
      %p81 = scmp.ne.s32.totalorder %s64, %s80
      %p82 = scmp.eq.s32.totalorder %s30, 0
      %p83 = por %p81, %p82
      %s85 = sadd.s32 %s84, 1
      %p88 = scmp.eq.s32.totalorder %s24, 1
      %p89 = scmp.ne.s32.totalorder %s84, %s86
      %p90 = scmp.eq.s32.totalorder %s24, 0
      %p91 = por %p89, %p90
      %p92 = scmp.ne.s32.totalorder %s84, %s86
      %p93 = scmp.eq.s32.totalorder %s29, 1
      %p94 = por %p92, %p93
      %p95 = scmp.ne.s32.totalorder %s86, %s87
      %p96 = scmp.eq.s32.totalorder %s29, 0
      %p97 = por %p95, %p96
      %p98 = scmp.ne.s32.totalorder %s86, %s87
      %p99 = scmp.eq.s32.totalorder %s30, 1
      %p100 = por %p98, %p99
      %p102 = scmp.ne.s32.totalorder %s87, %s101
      %p103 = scmp.eq.s32.totalorder %s30, 0
      %p104 = por %p102, %p103
      %s106 = sadd.s32 %s105, 1
      %p109 = scmp.eq.s32.totalorder %s24, 1
      %p110 = scmp.ne.s32.totalorder %s105, %s107
      %p111 = scmp.eq.s32.totalorder %s24, 0
      %p112 = por %p110, %p111
      %p113 = scmp.ne.s32.totalorder %s105, %s107
      %p114 = scmp.eq.s32.totalorder %s29, 1
      %p115 = por %p113, %p114
      %p116 = scmp.ne.s32.totalorder %s107, %s108
      %p117 = scmp.eq.s32.totalorder %s29, 0
      %p118 = por %p116, %p117
      %p119 = scmp.ne.s32.totalorder %s107, %s108
      %p120 = scmp.eq.s32.totalorder %s30, 1
      %p121 = por %p119, %p120
      %p123 = scmp.ne.s32.totalorder %s108, %s122
      %p124 = scmp.eq.s32.totalorder %s30, 0
      %p125 = por %p123, %p124
      %s127 = sadd.s32 %s126, 1
      %p130 = scmp.eq.s32.totalorder %s24, 1
      %p131 = scmp.ne.s32.totalorder %s126, %s128
      %p132 = scmp.eq.s32.totalorder %s24, 0
      %p133 = por %p131, %p132
      %p134 = scmp.ne.s32.totalorder %s126, %s128
      %p135 = scmp.eq.s32.totalorder %s29, 1
      %p136 = por %p134, %p135
      %p137 = scmp.ne.s32.totalorder %s128, %s129
      %p138 = scmp.eq.s32.totalorder %s29, 0
      %p139 = por %p137, %p138
      %p140 = scmp.ne.s32.totalorder %s128, %s129
      %p141 = scmp.eq.s32.totalorder %s30, 1
      %p142 = por %p140, %p141
      %p144 = scmp.ne.s32.totalorder %s129, %s143
      %p145 = scmp.eq.s32.totalorder %s30, 0
      %p146 = por %p144, %p145
      %s148 = sadd.s32 %s147, 1
      %p151 = scmp.eq.s32.totalorder %s24, 1
      %p152 = scmp.ne.s32.totalorder %s147, %s149
      %p153 = scmp.eq.s32.totalorder %s24, 0
      %p154 = por %p152, %p153
      %p155 = scmp.ne.s32.totalorder %s147, %s149
      %p156 = scmp.eq.s32.totalorder %s29, 1
      %p157 = por %p155, %p156
      %p158 = scmp.ne.s32.totalorder %s149, %s150
      %p159 = scmp.eq.s32.totalorder %s29, 0
      %p160 = por %p158, %p159
      %p161 = scmp.ne.s32.totalorder %s149, %s150
      %p162 = scmp.eq.s32.totalorder %s30, 1
      %p163 = por %p161, %p162
      %p165 = scmp.ne.s32.totalorder %s150, %s164
      %p166 = scmp.eq.s32.totalorder %s30, 0
      %p167 = por %p165, %p166
      %s169 = sadd.s32 %s168, 1
      %p172 = scmp.eq.s32.totalorder %s24, 1
      %p173 = scmp.ne.s32.totalorder %s168, %s170
      %p174 = scmp.eq.s32.totalorder %s24, 0
      %p175 = por %p173, %p174
      %p176 = scmp.ne.s32.totalorder %s168, %s170
      %p177 = scmp.eq.s32.totalorder %s29, 1
      %p178 = por %p176, %p177
      %p179 = scmp.ne.s32.totalorder %s170, %s171
      %p180 = scmp.eq.s32.totalorder %s29, 0
      %p181 = por %p179, %p180
      %p182 = scmp.ne.s32.totalorder %s170, %s171
      %p183 = scmp.eq.s32.totalorder %s30, 1
      %p184 = por %p182, %p183
      %p186 = scmp.ne.s32.totalorder %s171, %s185
      %p187 = scmp.eq.s32.totalorder %s30, 0
      %p188 = por %p186, %p187
      %s190 = sadd.s32 %s189, 1
      %p193 = scmp.eq.s32.totalorder %s24, 1
      %p194 = scmp.ne.s32.totalorder %s189, %s191
      %p195 = scmp.eq.s32.totalorder %s24, 0
      %p196 = por %p194, %p195
      %p197 = scmp.ne.s32.totalorder %s189, %s191
      %p198 = scmp.eq.s32.totalorder %s29, 1
      %p199 = por %p197, %p198
      %p200 = scmp.ne.s32.totalorder %s191, %s192
      %p201 = scmp.eq.s32.totalorder %s29, 0
      %p202 = por %p200, %p201
      %p203 = scmp.ne.s32.totalorder %s191, %s192
      %p204 = scmp.eq.s32.totalorder %s30, 1
      %p205 = por %p203, %p204
      %p207 = scmp.ne.s32.totalorder %s192, %s206
      %p208 = scmp.eq.s32.totalorder %s30, 0
      %p209 = por %p207, %p208
      %s210 = ssub.s32 %s24, %s31
      %p211 = scmp.eq.s32.totalorder %s210, 0
      %s213 = sadd.s32 %s212, 1
      %s214 = scalar_select %p211, %s212, %s213
      %p217 = pneg %p211
      %p218 = scmp.eq.s32.totalorder %s24, 1
      %p219 = por %p217, %p218
      %p220 = scmp.ne.s32.totalorder %s212, %s215
      %p221 = scmp.eq.s32.totalorder %s24, 0
      %p222 = por %p220, %p221
      %p223 = scmp.ne.s32.totalorder %s212, %s215
      %p224 = scmp.eq.s32.totalorder %s29, 1
      %p225 = por %p223, %p224
      %p226 = scmp.ne.s32.totalorder %s215, %s216
      %p227 = scmp.eq.s32.totalorder %s29, 0
      %p228 = por %p226, %p227
      %p229 = scmp.ne.s32.totalorder %s215, %s216
      %p230 = scmp.eq.s32.totalorder %s30, 1
      %p231 = por %p229, %p230
      %p233 = scmp.ne.s32.totalorder %s216, %s232
      %p234 = scmp.eq.s32.totalorder %s30, 0
      %p235 = por %p233, %p234
      %p236 = scmp.le.s32.totalorder 1, %s24
      %p237 = scmp.lt.s32.totalorder %s24, 3
      %p238 = pnand %p236, %p237
      %p239 = pneg %p238
      // Predicated region
      $region9: #{tpu_custom_call.1} parent=5 // pred_check
        _
      $region10: #{tpu_custom_call.1} parent=5 // pred_check_branch
        %241 = sbr.rel (%p238) target = $region12
      $region11: #{tpu_custom_call.1} parent=5 // pred_region
        %s242 = ssub.s32 %s24, 1
        // Predicated region
        $region13: #{tpu_custom_call.1} parent=11 // pred_check
          %p243 = pneg %p97
        $region14: #{tpu_custom_call.1} parent=11 // pred_check_branch
          %245 = sbr.rel (%p243) target = $region16
        $region15: #{tpu_custom_call.1} parent=11 // pred_region
          %247 = vsyncadd [#allocation6], 0
          %s248 = sshll.u32 %s2, 4
          %s249 = int_to_ptr.hbm [resolvable:$true] %s248
          %s250 = sshll.u32 [#allocation7], 4
          %s251 = int_to_ptr.vmem [resolvable:$true] %s250
          %256 = dma.hbm_to_vmem [thread:$0]  %s249, 512, %s251, [#allocation6], 128, 128, 8
        $region16: #{tpu_custom_call.1} parent=11 // pred_fallthru
          _
        // Predicated region
        $region17: #{tpu_custom_call.1} parent=11 // pred_check
          %p257 = pneg %p118
        $region18: #{tpu_custom_call.1} parent=11 // pred_check_branch
          %259 = sbr.rel (%p257) target = $region20
        $region19: #{tpu_custom_call.1} parent=11 // pred_region
          _
        $region20: #{tpu_custom_call.1} parent=11 // pred_fallthru
          _
        // Predicated region
        $region21: #{tpu_custom_call.1} parent=11 // pred_check
          %p260 = pneg %p139
        $region22: #{tpu_custom_call.1} parent=11 // pred_check_branch
          %262 = sbr.rel (%p260) target = $region24
        $region23: #{tpu_custom_call.1} parent=11 // pred_region
          %264 = vsyncadd [#allocation9], 0
          %s265 = sshll.u32 %s4, 4
          %s266 = int_to_ptr.hbm [resolvable:$true] %s265
          %s267 = sshll.u32 [#allocation8], 4
          %s268 = int_to_ptr.vmem [resolvable:$true] %s267
          %273 = dma.hbm_to_vmem [thread:$0]  %s266, 512, %s268, [#allocation9], 128, 128, 8
        $region24: #{tpu_custom_call.1} parent=11 // pred_fallthru
          _
        // Predicated region
        $region25: #{tpu_custom_call.1} parent=11 // pred_check
          %p274 = pneg %p160
        $region26: #{tpu_custom_call.1} parent=11 // pred_check_branch
          %276 = sbr.rel (%p274) target = $region28
        $region27: #{tpu_custom_call.1} parent=11 // pred_region
          _
        $region28: #{tpu_custom_call.1} parent=11 // pred_fallthru
          _
        // Predicated region
        $region29: #{tpu_custom_call.1} parent=11 // pred_check
          %p277 = pneg %p181
        $region30: #{tpu_custom_call.1} parent=11 // pred_check_branch
          %279 = sbr.rel (%p277) target = $region32
        $region31: #{tpu_custom_call.1} parent=11 // pred_region
          _
        $region32: #{tpu_custom_call.1} parent=11 // pred_fallthru
          _
        // Predicated region
        $region33: #{tpu_custom_call.1} parent=11 // pred_check
          %p280 = pneg %p202
        $region34: #{tpu_custom_call.1} parent=11 // pred_check_branch
          %282 = sbr.rel (%p280) target = $region36
        $region35: #{tpu_custom_call.1} parent=11 // pred_region
          _
        $region36: #{tpu_custom_call.1} parent=11 // pred_fallthru
          _
      $region12: #{tpu_custom_call.1} parent=5 // pred_fallthru
        _
      %p283 = scmp.lt.s32.totalorder %s24, 2
      // Predicated region
      $region37: #{tpu_custom_call.1} parent=5 // pred_check
        %p284 = pneg %p283
      $region38: #{tpu_custom_call.1} parent=5 // pred_check_branch
        %286 = sbr.rel (%p284) target = $region40
      $region39: #{tpu_custom_call.1} parent=5 // pred_region
        // Predicated region
        $region41: #{tpu_custom_call.1} parent=39 // pred_check
          %p287 = pneg %p44
        $region42: #{tpu_custom_call.1} parent=39 // pred_check_branch
          %289 = sbr.rel (%p287) target = $region44
        $region43: #{tpu_custom_call.1} parent=39 // pred_region
          %s290 = sand.u32 %s34, 1
          %s291 = scalar_lea.sflag [#allocation3], %s290
          %s292 = sand.u32 %s34, 1
          %s293 = smul.addr %s292, 8
          %s294 = scalar_lea.vmem [#allocation2], %s293
          %296 = vsyncadd %s291, 0
          %s297 = smul.addr %s24, 8
          %s298 = scalar_lea.hbm %s0, %s297
          %s300 = sshll.u32 %s298, 4
          %s301 = int_to_ptr.hbm [resolvable:$true] %s300
          %s302 = sshll.u32 %s294, 4
          %s303 = int_to_ptr.vmem [resolvable:$true] %s302
          %305 = dma.hbm_to_vmem [thread:$0]  %s301, 128, %s303, %s291
        $region44: #{tpu_custom_call.1} parent=39 // pred_fallthru
          _
        // Predicated region
        $region45: #{tpu_custom_call.1} parent=39 // pred_check
          %p306 = pneg %p70
        $region46: #{tpu_custom_call.1} parent=39 // pred_check_branch
          %308 = sbr.rel (%p306) target = $region48
        $region47: #{tpu_custom_call.1} parent=39 // pred_region
          %s309 = sand.u32 %s24, 1
          %s310 = scalar_lea.sflag [#allocation6], %s309
          %s311 = sand.u32 %s60, 1
          %s312 = scalar_lea.vmem [#allocation5], %s311
          %314 = vsyncadd %s310, 0
          %s315 = scalar_lea.hbm %s1, %s24
          %s317 = sshll.u32 %s315, 4
          %s318 = int_to_ptr.hbm [resolvable:$true] %s317
          %s319 = sshll.u32 %s312, 4
          %s320 = int_to_ptr.vmem [resolvable:$true] %s319
          %322 = dma.hbm_to_vmem [thread:$0]  %s318, 16, %s320, %s310
        $region48: #{tpu_custom_call.1} parent=39 // pred_fallthru
          _
      $region40: #{tpu_custom_call.1} parent=5 // pred_fallthru
        _
      %p323 = scmp.le.s32.totalorder 1, %s24
      %p324 = scmp.lt.s32.totalorder %s24, 3
      %p325 = pnand %p323, %p324
      %p326 = pneg %p325
      // Predicated region
      $region49: #{tpu_custom_call.1} parent=5 // pred_check
        _
      $region50: #{tpu_custom_call.1} parent=5 // pred_check_branch
        %328 = sbr.rel (%p325) target = $region52
      $region51: #{tpu_custom_call.1} parent=5 // pred_region
        %s329 = ssub.s32 %s24, 1
        %s330 = sand.u32 %s37, 1
        %s331 = scalar_lea.sflag [#allocation3], %s330
        %s332 = sand.u32 %s37, 1
        %s333 = smul.addr %s332, 8
        %s334 = scalar_lea.vmem [#allocation2], %s333
        // Predicated region
        $region53: #{tpu_custom_call.1} parent=51 // pred_check
          %p335 = pneg %p50
        $region54: #{tpu_custom_call.1} parent=51 // pred_check_branch
          %337 = sbr.rel (%p335) target = $region56
        $region55: #{tpu_custom_call.1} parent=51 // pred_region
          %339 = dma.done %s331, 128
        $region56: #{tpu_custom_call.1} parent=51 // pred_fallthru
          _
        %s340 = sand.u32 %s29, 1
        %s341 = scalar_lea.sflag [#allocation6], %s340
        %s342 = sand.u32 %s63, 1
        %s343 = scalar_lea.vmem [#allocation5], %s342
        // Predicated region
        $region57: #{tpu_custom_call.1} parent=51 // pred_check
          %p344 = pneg %p76
        $region58: #{tpu_custom_call.1} parent=51 // pred_check_branch
          %346 = sbr.rel (%p344) target = $region60
        $region59: #{tpu_custom_call.1} parent=51 // pred_region
          %348 = dma.done %s341, 16
        $region60: #{tpu_custom_call.1} parent=51 // pred_fallthru
          _
        // Predicated region
        $region61: #{tpu_custom_call.1} parent=51 // pred_check
          %p349 = pneg %p97
        $region62: #{tpu_custom_call.1} parent=51 // pred_check_branch
          %351 = sbr.rel (%p349) target = $region64
        $region63: #{tpu_custom_call.1} parent=51 // pred_region
          %353 = dma.done [#allocation6], 512
        $region64: #{tpu_custom_call.1} parent=51 // pred_fallthru
          _
        // Predicated region
        $region65: #{tpu_custom_call.1} parent=51 // pred_check
          %p354 = pneg %p139
        $region66: #{tpu_custom_call.1} parent=51 // pred_check_branch
          %356 = sbr.rel (%p354) target = $region68
        $region67: #{tpu_custom_call.1} parent=51 // pred_region
          %358 = dma.done [#allocation9], 512
        $region68: #{tpu_custom_call.1} parent=51 // pred_fallthru
          _
        %s359 = sand.u32 %s37, 1
        %s360 = scalar_lea.sflag [#allocation3], %s359
        %s361 = sand.u32 %s37, 1
        %s362 = smul.addr %s361, 8
        %s363 = scalar_lea.vmem [#allocation2], %s362
        %p364 = pneg %p50
        %p365 = pneg %p47
        %s366 = sand.u32 %s29, 1
        %s367 = scalar_lea.sflag [#allocation6], %s366
        %s368 = sand.u32 %s63, 1
        %s369 = scalar_lea.vmem [#allocation5], %s368
        %p370 = pneg %p76
        %p371 = pneg %p73
        %p372 = pneg %p97
        %p373 = pneg %p94
        %p374 = pneg %p118
        %p375 = pneg %p115
        %p376 = pneg %p139
        %p377 = pneg %p136
        %p378 = pneg %p160
        %p379 = pneg %p157
        %p380 = pneg %p181
        %p381 = pneg %p178
        %p382 = pneg %p202
        %p383 = pneg %p199
        %p384 = pneg %p228
        %p385 = pneg %p225
        %s386 = sand.u32 %s215, 1
        %s387 = scalar_lea.sflag [#allocation4], %s386
        %s388 = sand.u32 %s215, 1
        %s389 = smul.addr %s388, 8
        %s390 = scalar_lea.vmem [#allocation10], %s389
        %v391 = vld [vmem:[%s334] sm:$0xff]
        %v392 = vld [vmem:[#allocation7] sm:$0xff]
        %v393 = vld [vmem:[#allocation7 + $0x8] sm:$0xff]
        %v394 = vld [vmem:[#allocation7 + $0x10] sm:$0xff]
        %v395 = vld [vmem:[#allocation7 + $0x18] sm:$0xff]
        %v396 = vld [vmem:[%s3] sm:$0x1]
        %v398 = vperm.slane %v396, 0
        %vm400 = vcmask 261120
        %v402 = vsel %vm400, %v391, 0
        %404 = vmatpush.msra.mxu0 0.0
        %405 = vmatpush.msra.mxu0 0.0
        %406 = vmatpush.msra.mxu0 0.0
        %407 = vmatpush.msra.mxu0 0.0
        %408 = vmatpush.msra.mxu0 0.0
        %409 = vmatpush.msra.mxu0 0.0
        %410 = vmatpush.msra.mxu0 0.0
        %411 = vmatpush.msra.mxu0 0.0
        %412 = vmatpush.msra.mxu0 0.0
        %413 = vmatpush.msra.mxu0 0.0
        %414 = vmatpush.msra.mxu0 0.0
        %415 = vmatpush.msra.mxu0 0.0
        %416 = vmatpush.msra.mxu0 %v395
        %417 = vmatpush.msra.mxu0 %v394
        %418 = vmatpush.msra.mxu0 %v393
        %419 = vmatpush.msra.mxu0 %v392
        %420 = vmatmul.f32.gmra.mxu0 %v402
        %v421 = vpop.f32.mrf.mxu0
        %v422 = vadd.f32 %v398, %v421
        %423 = vdwg.mxu0
        %v424 = vld [vmem:[%s343] sm:$0x1]
        %426 = vrot.lane.b32.xlu0 %v422, 96
        %v427 = vpop.permute.xlu0 %426
        %vm428 = vcmask 64512
        %v429 = vsel %vm428, %v422, 0
        %v431 = vsel %vm428, %v427, 0
        %433 = vmatpush.xpose.msra.mxu0 0.0
        %434 = vmatpush.xpose.msra.mxu0 0.0
        %435 = vmatpush.xpose.msra.mxu0 0.0
        %436 = vmatpush.xpose.msra.mxu0 0.0
        %437 = vmatpush.xpose.msra.mxu0 0.0
        %438 = vmatpush.xpose.msra.mxu0 0.0
        %439 = vmatpush.xpose.msra.mxu0 0.0
        %440 = vmatpush.xpose.msra.mxu0 0.0
        %441 = vmatpush.xpose.msra.mxu0 0.0
        %442 = vmatpush.xpose.msra.mxu0 0.0
        %443 = vmatpush.xpose.msra.mxu0 0.0
        %444 = vmatpush.xpose.msra.mxu0 0.0
        %445 = vmatpush.xpose.msra.mxu0 0.0
        %446 = vmatpush.xpose.msra.mxu0 0.0
        %447 = vmatpush.xpose.msra.mxu0 0.0
        %448 = vmatpush.xpose.msra.mxu0 %v431
        %449 = vmatmul.f32.gmra.mxu0 %v429
        %v450 = vpop.f32.mrf.mxu0
        %v451 = vadd.f32 0.0, %v450
        %452 = vdwg.mxu0
        %v453 = vmul.f32 %v451, 0.35355338
        %vm454 = vcmp.eq.f32.partialorder %v424, 0.0
        %v455 = vsel %vm454, 1, 0
        %v456 = vperm.slane %v455, 0
        %vm457 = vcmp.eq.s32.totalorder %v456, 1
        %v458 = vsel %vm457, -1e+09, %v453
        %v459 = vsel %vm428, %v458, -inf
        %460 = vmax.xlane.f32.xlu0 %v459
        %v461 = vpop.xlane.xlu0 %460
        %v462 = vsub.f32 %v458, %v461
        %v463 = vmul.f32 %v462, 1.442695
        %v464 = vpow.pop %v463
        %v465 = vsel %vm428, %v464, 0.0
        %466 = vadd.xlane.f32.xlu0 %v465
        %v467 = vpop.xlane.xlu0 %466
        %v468 = vrcp.pop %v467
        %v469 = vmul.f32 %v464, %v468
        %470 = vrot.lane.b32.xlu0 %v422, 64
        %v471 = vpop.permute.xlu0 %470
        %v474 = vsel %vm428, %v469, 0
        %476 = vmatpush.msra.mxu0 0.0
        %477 = vmatpush.msra.mxu0 0.0
        %478 = vmatpush.msra.mxu0 0.0
        %479 = vmatpush.msra.mxu0 0.0
        %480 = vmatpush.msra.mxu0 0.0
        %481 = vmatpush.msra.mxu0 0.0
        %482 = vmatpush.msra.mxu0 0.0
        %483 = vmatpush.msra.mxu0 0.0
        %484 = vmatpush.msra.mxu0 0.0
        %485 = vmatpush.msra.mxu0 0.0
        %486 = vmatpush.msra.mxu0 0.0
        %487 = vmatpush.msra.mxu0 0.0
        %488 = vmatpush.msra.mxu0 0.0
        %489 = vmatpush.msra.mxu0 0.0
        %490 = vmatpush.msra.mxu0 0.0
        %491 = vmatpush.msra.mxu0 %v471
        %492 = vmatmul.f32.gmra.mxu0 %v474
        %v493 = vpop.f32.mrf.mxu0
        %v494 = vadd.f32 0.0, %v493
        %495 = vdwg.mxu0
        %496 = vrot.lane.b32.xlu0 %v422, 120
        %v497 = vpop.permute.xlu0 %496
        %498 = vrot.lane.b32.xlu0 %v422, 88
        %v499 = vpop.permute.xlu0 %498
        %v500 = vsel %vm428, %v497, 0
        %v502 = vsel %vm428, %v499, 0
        %504 = vmatpush.xpose.msra.mxu0 0.0
        %505 = vmatpush.xpose.msra.mxu0 0.0
        %506 = vmatpush.xpose.msra.mxu0 0.0
        %507 = vmatpush.xpose.msra.mxu0 0.0
        %508 = vmatpush.xpose.msra.mxu0 0.0
        %509 = vmatpush.xpose.msra.mxu0 0.0
        %510 = vmatpush.xpose.msra.mxu0 0.0
        %511 = vmatpush.xpose.msra.mxu0 0.0
        %512 = vmatpush.xpose.msra.mxu0 0.0
        %513 = vmatpush.xpose.msra.mxu0 0.0
        %514 = vmatpush.xpose.msra.mxu0 0.0
        %515 = vmatpush.xpose.msra.mxu0 0.0
        %516 = vmatpush.xpose.msra.mxu0 0.0
        %517 = vmatpush.xpose.msra.mxu0 0.0
        %518 = vmatpush.xpose.msra.mxu0 0.0
        %519 = vmatpush.xpose.msra.mxu0 %v502
        %520 = vmatmul.f32.gmra.mxu0 %v500
        %v521 = vpop.f32.mrf.mxu0
        %v522 = vadd.f32 0.0, %v521
        %523 = vdwg.mxu0
        %v524 = vmul.f32 %v522, 0.35355338
        %v525 = vsel %vm457, -1e+09, %v524
        %v526 = vsel %vm428, %v525, -inf
        %527 = vmax.xlane.f32.xlu0 %v526
        %v528 = vpop.xlane.xlu0 %527
        %v529 = vsub.f32 %v525, %v528
        %v530 = vmul.f32 %v529, 1.442695
        %v531 = vpow.pop %v530
        %v532 = vsel %vm428, %v531, 0.0
        %533 = vadd.xlane.f32.xlu0 %v532
        %v534 = vpop.xlane.xlu0 %533
        %v535 = vrcp.pop %v534
        %v536 = vmul.f32 %v531, %v535
        %537 = vrot.lane.b32.xlu0 %v422, 56
        %v538 = vpop.permute.xlu0 %537
        %v541 = vsel %vm428, %v536, 0
        %543 = vmatpush.msra.mxu0 0.0
        %544 = vmatpush.msra.mxu0 0.0
        %545 = vmatpush.msra.mxu0 0.0
        %546 = vmatpush.msra.mxu0 0.0
        %547 = vmatpush.msra.mxu0 0.0
        %548 = vmatpush.msra.mxu0 0.0
        %549 = vmatpush.msra.mxu0 0.0
        %550 = vmatpush.msra.mxu0 0.0
        %551 = vmatpush.msra.mxu0 0.0
        %552 = vmatpush.msra.mxu0 0.0
        %553 = vmatpush.msra.mxu0 0.0
        %554 = vmatpush.msra.mxu0 0.0
        %555 = vmatpush.msra.mxu0 0.0
        %556 = vmatpush.msra.mxu0 0.0
        %557 = vmatpush.msra.mxu0 0.0
        %558 = vmatpush.msra.mxu0 %v538
        %559 = vmatmul.f32.gmra.mxu0 %v541
        %v560 = vpop.f32.mrf.mxu0
        %v561 = vadd.f32 0.0, %v560
        %562 = vdwg.mxu0
        %563 = vrot.lane.b32.xlu0 %v422, 112
        %v564 = vpop.permute.xlu0 %563
        %565 = vrot.lane.b32.xlu0 %v422, 80
        %v566 = vpop.permute.xlu0 %565
        %v567 = vsel %vm428, %v564, 0
        %v569 = vsel %vm428, %v566, 0
        %571 = vmatpush.xpose.msra.mxu0 0.0
        %572 = vmatpush.xpose.msra.mxu0 0.0
        %573 = vmatpush.xpose.msra.mxu0 0.0
        %574 = vmatpush.xpose.msra.mxu0 0.0
        %575 = vmatpush.xpose.msra.mxu0 0.0
        %576 = vmatpush.xpose.msra.mxu0 0.0
        %577 = vmatpush.xpose.msra.mxu0 0.0
        %578 = vmatpush.xpose.msra.mxu0 0.0
        %579 = vmatpush.xpose.msra.mxu0 0.0
        %580 = vmatpush.xpose.msra.mxu0 0.0
        %581 = vmatpush.xpose.msra.mxu0 0.0
        %582 = vmatpush.xpose.msra.mxu0 0.0
        %583 = vmatpush.xpose.msra.mxu0 0.0
        %584 = vmatpush.xpose.msra.mxu0 0.0
        %585 = vmatpush.xpose.msra.mxu0 0.0
        %586 = vmatpush.xpose.msra.mxu0 %v569
        %587 = vmatmul.f32.gmra.mxu0 %v567
        %v588 = vpop.f32.mrf.mxu0
        %v589 = vadd.f32 0.0, %v588
        %590 = vdwg.mxu0
        %v591 = vmul.f32 %v589, 0.35355338
        %v592 = vsel %vm457, -1e+09, %v591
        %v593 = vsel %vm428, %v592, -inf
        %594 = vmax.xlane.f32.xlu0 %v593
        %v595 = vpop.xlane.xlu0 %594
        %v596 = vsub.f32 %v592, %v595
        %v597 = vmul.f32 %v596, 1.442695
        %v598 = vpow.pop %v597
        %v599 = vsel %vm428, %v598, 0.0
        %600 = vadd.xlane.f32.xlu0 %v599
        %v601 = vpop.xlane.xlu0 %600
        %v602 = vrcp.pop %v601
        %v603 = vmul.f32 %v598, %v602
        %604 = vrot.lane.b32.xlu0 %v422, 48
        %v605 = vpop.permute.xlu0 %604
        %v608 = vsel %vm428, %v603, 0
        %610 = vmatpush.msra.mxu0 0.0
        %611 = vmatpush.msra.mxu0 0.0
        %612 = vmatpush.msra.mxu0 0.0
        %613 = vmatpush.msra.mxu0 0.0
        %614 = vmatpush.msra.mxu0 0.0
        %615 = vmatpush.msra.mxu0 0.0
        %616 = vmatpush.msra.mxu0 0.0
        %617 = vmatpush.msra.mxu0 0.0
        %618 = vmatpush.msra.mxu0 0.0
        %619 = vmatpush.msra.mxu0 0.0
        %620 = vmatpush.msra.mxu0 0.0
        %621 = vmatpush.msra.mxu0 0.0
        %622 = vmatpush.msra.mxu0 0.0
        %623 = vmatpush.msra.mxu0 0.0
        %624 = vmatpush.msra.mxu0 0.0
        %625 = vmatpush.msra.mxu0 %v605
        %626 = vmatmul.f32.gmra.mxu0 %v608
        %v627 = vpop.f32.mrf.mxu0
        %v628 = vadd.f32 0.0, %v627
        %629 = vdwg.mxu0
        %630 = vrot.lane.b32.xlu0 %v422, 104
        %v631 = vpop.permute.xlu0 %630
        %632 = vrot.lane.b32.xlu0 %v422, 72
        %v633 = vpop.permute.xlu0 %632
        %v634 = vsel %vm428, %v631, 0
        %v636 = vsel %vm428, %v633, 0
        %638 = vmatpush.xpose.msra.mxu0 0.0
        %639 = vmatpush.xpose.msra.mxu0 0.0
        %640 = vmatpush.xpose.msra.mxu0 0.0
        %641 = vmatpush.xpose.msra.mxu0 0.0
        %642 = vmatpush.xpose.msra.mxu0 0.0
        %643 = vmatpush.xpose.msra.mxu0 0.0
        %644 = vmatpush.xpose.msra.mxu0 0.0
        %645 = vmatpush.xpose.msra.mxu0 0.0
        %646 = vmatpush.xpose.msra.mxu0 0.0
        %647 = vmatpush.xpose.msra.mxu0 0.0
        %648 = vmatpush.xpose.msra.mxu0 0.0
        %649 = vmatpush.xpose.msra.mxu0 0.0
        %650 = vmatpush.xpose.msra.mxu0 0.0
        %651 = vmatpush.xpose.msra.mxu0 0.0
        %652 = vmatpush.xpose.msra.mxu0 0.0
        %653 = vmatpush.xpose.msra.mxu0 %v636
        %654 = vmatmul.f32.gmra.mxu0 %v634
        %v655 = vpop.f32.mrf.mxu0
        %v656 = vadd.f32 0.0, %v655
        %657 = vdwg.mxu0
        %v658 = vmul.f32 %v656, 0.35355338
        %v659 = vsel %vm457, -1e+09, %v658
        %v660 = vsel %vm428, %v659, -inf
        %661 = vmax.xlane.f32.xlu0 %v660
        %v662 = vpop.xlane.xlu0 %661
        %v663 = vsub.f32 %v659, %v662
        %v664 = vmul.f32 %v663, 1.442695
        %v665 = vpow.pop %v664
        %v666 = vsel %vm428, %v665, 0.0
        %667 = vadd.xlane.f32.xlu0 %v666
        %v668 = vpop.xlane.xlu0 %667
        %v669 = vrcp.pop %v668
        %v670 = vmul.f32 %v665, %v669
        %671 = vrot.lane.b32.xlu0 %v422, 40
        %v672 = vpop.permute.xlu0 %671
        %v675 = vsel %vm428, %v670, 0
        %677 = vmatpush.msra.mxu0 0.0
        %678 = vmatpush.msra.mxu0 0.0
        %679 = vmatpush.msra.mxu0 0.0
        %680 = vmatpush.msra.mxu0 0.0
        %681 = vmatpush.msra.mxu0 0.0
        %682 = vmatpush.msra.mxu0 0.0
        %683 = vmatpush.msra.mxu0 0.0
        %684 = vmatpush.msra.mxu0 0.0
        %685 = vmatpush.msra.mxu0 0.0
        %686 = vmatpush.msra.mxu0 0.0
        %687 = vmatpush.msra.mxu0 0.0
        %688 = vmatpush.msra.mxu0 0.0
        %689 = vmatpush.msra.mxu0 0.0
        %690 = vmatpush.msra.mxu0 0.0
        %691 = vmatpush.msra.mxu0 0.0
        %692 = vmatpush.msra.mxu0 %v672
        %693 = vmatmul.f32.gmra.mxu0 %v675
        %v694 = vpop.f32.mrf.mxu0
        %v695 = vadd.f32 0.0, %v694
        %696 = vdwg.mxu0
        %698 = vrot.lane.b32.xlu0 %v561, 8
        %v699 = vpop.permute.xlu0 %698
        %702 = vrot.lane.b32.xlu0 %v628, 16
        %v703 = vpop.permute.xlu0 %702
        %706 = vrot.lane.b32.xlu0 %v695, 24
        %v707 = vpop.permute.xlu0 %706
        %v709 = vsel %vm428, %v494, %v699
        %vm710 = vcmask 130048
        %v711 = vsel %vm710, %v709, %v703
        %vm712 = vcmask 195584
        %v713 = vsel %vm712, %v711, %v707
        %v714 = vld [vmem:[#allocation8] sm:$0xff]
        %v715 = vld [vmem:[#allocation8 + $0x8] sm:$0xff]
        %v716 = vld [vmem:[#allocation8 + $0x10] sm:$0xff]
        %v717 = vld [vmem:[#allocation8 + $0x18] sm:$0xff]
        %v718 = vld [vmem:[%s5] sm:$0x1]
        %v720 = vperm.slane %v718, 0
        %v723 = vsel %vm400, %v713, 0
        %725 = vmatpush.msra.mxu0 0.0
        %726 = vmatpush.msra.mxu0 0.0
        %727 = vmatpush.msra.mxu0 0.0
        %728 = vmatpush.msra.mxu0 0.0
        %729 = vmatpush.msra.mxu0 0.0
        %730 = vmatpush.msra.mxu0 0.0
        %731 = vmatpush.msra.mxu0 0.0
        %732 = vmatpush.msra.mxu0 0.0
        %733 = vmatpush.msra.mxu0 0.0
        %734 = vmatpush.msra.mxu0 0.0
        %735 = vmatpush.msra.mxu0 0.0
        %736 = vmatpush.msra.mxu0 0.0
        %737 = vmatpush.msra.mxu0 %v717
        %738 = vmatpush.msra.mxu0 %v716
        %739 = vmatpush.msra.mxu0 %v715
        %740 = vmatpush.msra.mxu0 %v714
        %741 = vmatmul.f32.gmra.mxu0 %v723
        %v742 = vpop.f32.mrf.mxu0
        %v743 = vadd.f32 %v720, %v742
        %744 = vdwg.mxu0
        %v745 = vadd.f32 %v391, %v743
        %v746 = vsel %vm400, %v745, 0.0
        %747 = vadd.xlane.f32.xlu0 %v746
        %v748 = vpop.xlane.xlu0 %747
        %v749 = vrcp.pop 32.0
        %v750 = vmul.f32 32.0, %v749
        %v751 = vsub.f32 1.0, %v750
        %v752 = vmul.f32 %v749, %v751
        %v753 = vadd.f32 %v749, %v752
        %vm754 = vweird.f32 %v749
        %v755 = vsel %vm754, %v749, %v753
        %v756 = vmul.f32 %v748, %v755
        %v757 = vsub.f32 %v745, %v756
        %v758 = vmul.f32 %v757, %v757
        %v759 = vsel %vm400, %v758, 0.0
        %760 = vadd.xlane.f32.xlu0 %v759
        %v761 = vpop.xlane.xlu0 %760
        %v762 = vmul.f32 %v761, 0.032258064
        %v763 = vrsqrt.pop %v762
        %v764 = vmul.f32 %v763, %v762
        %v765 = vmul.f32 %v764, %v763
        %v766 = vmul.f32 0.5, %v765
        %v767 = vsub.f32 1.5, %v766
        %v768 = vmul.f32 %v763, %v767
        %v769 = vmul.f32 %v762, %v768
        %vm770 = vcmp.eq.f32.partialorder %v762, inf
        %v771 = vsel %vm770, %v762, %v769
        %vm772 = vcmp.eq.f32.partialorder %v762, 0.0
        %v773 = vand.u32 %v762, 2147483648
        %v774 = vsel %vm772, %v773, %v771
        %v775 = vld [vmem:[%s6] sm:$0x1]
        %v776 = vadd.f32 %v774, 1e-06
        %v777 = vrcp.pop %v776
        %v778 = vmul.f32 %v776, %v777
        %v779 = vsub.f32 1.0, %v778
        %v780 = vmul.f32 %v777, %v779
        %v781 = vadd.f32 %v777, %v780
        %vm782 = vweird.f32 %v776
        %vm783 = vweird.f32 %v777
        %vm784 = vmor %vm782, %vm783
        %v785 = vsel %vm784, %v777, %v781
        %v786 = vand.u32 2147483647, %v776
        %vm787 = vcmp.eq.f32.partialorder %v786, 8.507059e+37
        %v788 = vand.u32 %v776, 2147483648
        %v789 = vor.u32 1.1754944e-38, %v788
        %v790 = vsel %vm787, %v789, %v785
        %v791 = vmul.f32 %v757, %v790
        %v793 = vperm.slane %v775, 0
        %v795 = vmul.f32 %v793, %v791
        %v796 = vld [vmem:[%s7] sm:$0x1]
        %v798 = vperm.slane %v796, 0
        %v800 = vadd.f32 %v795, %v798
        %801 = vst.msk [vmem:[%s390] sm:$0xff] %vm400, %v800
        %s802 = sand.u32 %s215, 1
        %s803 = scalar_lea.sflag [#allocation4], %s802
        %s804 = sand.u32 %s215, 1
        %s805 = smul.addr %s804, 8
        %s806 = scalar_lea.vmem [#allocation10], %s805
        // Predicated region
        $region69: #{tpu_custom_call.1} parent=51 // pred_check
          %p807 = pneg %p225
        $region70: #{tpu_custom_call.1} parent=51 // pred_check_branch
          %809 = sbr.rel (%p807) target = $region72
        $region71: #{tpu_custom_call.1} parent=51 // pred_region
          %811 = vsyncadd %s803, 0
          %s812 = smul.addr %s29, 8
          %s813 = scalar_lea.hbm %s8, %s812
          %s815 = sshll.u32 %s806, 4
          %s816 = int_to_ptr.vmem [resolvable:$true] %s815
          %s817 = sshll.u32 %s813, 4
          %s818 = int_to_ptr.hbm [resolvable:$true] %s817
          %820 = dma.vmem_to_hbm [thread:$0]  %s816, 128, %s818, %s803
        $region72: #{tpu_custom_call.1} parent=51 // pred_fallthru
          _
      $region52: #{tpu_custom_call.1} parent=5 // pred_fallthru
        _
      %p821 = scmp.le.s32.totalorder 2, %s24
      // Predicated region
      $region73: #{tpu_custom_call.1} parent=5 // pred_check
        %p822 = pneg %p821
      $region74: #{tpu_custom_call.1} parent=5 // pred_check_branch
        %824 = sbr.rel (%p822) target = $region76
      $region75: #{tpu_custom_call.1} parent=5 // pred_region
        %s825 = ssub.s32 %s24, 2
        // Predicated region
        $region77: #{tpu_custom_call.1} parent=75 // pred_check
          %p826 = pneg %p231
        $region78: #{tpu_custom_call.1} parent=75 // pred_check_branch
          %828 = sbr.rel (%p826) target = $region80
        $region79: #{tpu_custom_call.1} parent=75 // pred_region
          %s829 = sand.u32 %s216, 1
          %s830 = scalar_lea.sflag [#allocation4], %s829
          %s831 = sand.u32 %s216, 1
          %s832 = smul.addr %s831, 8
          %s833 = scalar_lea.vmem [#allocation10], %s832
          %835 = dma.done %s830, 128
        $region80: #{tpu_custom_call.1} parent=75 // pred_fallthru
          _
      $region76: #{tpu_custom_call.1} parent=5 // pred_fallthru
        _
    $region6: #{tpu_custom_call.1} parent=1 // loop_footer
      %s28 = sadd.s32 1, %s24
    $region7: #{tpu_custom_call.1} parent=1 // loop_footer_branch
      %23 = sbr.rel target = $region3
    $region8: #{tpu_custom_call.1} parent=1 // loop_exit
      _
    %836 = vsyncpa [#allocation3], 1
    %s837 = scalar_lea.sflag [#allocation3], 1
    %838 = vsyncpa %s837, 1
    %839 = vsyncpa [#allocation6], 1
    %s840 = scalar_lea.sflag [#allocation6], 1
    %841 = vsyncpa %s840, 1
    %842 = vsyncpa [#allocation9], 1
    %843 = vsyncpa [#allocation4], 1
    %s844 = scalar_lea.sflag [#allocation4], 1
    %845 = vsyncpa %s844, 1

</llo_original>
